<compile_context>
chip_gen: v5e
topology: v5e:2x2
jax: 0.10.0
libtpu: 0.0.40
codegen_flags: <defaults>
</compile_context>

<pallas_src>
import functools

import jax
import jax.numpy as jnp
from jax import lax
from jax.experimental import pallas as pl
from jax.experimental.pallas import tpu as pltpu


EPS = 1e-5  # nn.InstanceNorm2d default


def _round_up(x, m):
    return (x + m - 1) // m * m


def _conv_in_relu_kernel(p_ref, w_ref, gb_ref, o_ref, *scratch,
                         whole, g, hw_real, hw_pad, relu):
    # p_ref:  (1, KKCp, LT)      bf16 im2col patch tile (spatial on lanes)
    # w_ref:  (Cout, KKCp)       bf16 reshaped conv weight (resident)
    # gb_ref: (2, Cout, 1)       f32  [gamma; beta]
    # o_ref:  (g, Cout, HWp)     output block (resident across the HW grid axis)
    w = w_ref[...]
    gamma = gb_ref[0]                      # (Cout, 1)
    beta = gb_ref[1]                       # (Cout, 1)
    inv_hw = 1.0 / float(hw_real)

    # Single fused MXU call per grid step (bf16 in, f32 accumulate).
    y = jnp.dot(w, p_ref[0], preferred_element_type=jnp.float32)  # (Cout, LT)

    if whole:
        # Regime A: the tile holds g whole images -> stats per image from
        # static, lane-aligned slices; no cross-step state needed.
        for m in range(g):
            ym = y[:, m * hw_pad:(m + 1) * hw_pad]            # (Cout, HWp)
            s = jnp.sum(ym, axis=1, keepdims=True)
            s2 = jnp.sum(ym * ym, axis=1, keepdims=True)
            mean = s * inv_hw
            var = s2 * inv_hw - mean * mean
            scale = gamma * lax.rsqrt(var + EPS)
            shift = beta - mean * scale
            out = ym * scale + shift
            if relu:
                out = jnp.maximum(out, 0.0)
            o_ref[m] = out.astype(o_ref.dtype)
    else:
        # Regime B: one image per batch block, HW tiled across the last grid
        # axis; running sum / sum-of-squares in VMEM scratch, finalize on the
        # last HW step.
        y_acc, s_acc = scratch
        j = pl.program_id(1)
        lt = y.shape[1]

        @pl.when(j == 0)
        def _():
            s_acc[...] = jnp.zeros_like(s_acc)

        start = pl.multiple_of(j * lt, 128)
        y_acc[:, pl.ds(start, lt)] = y
        s_acc[0] = s_acc[0] + jnp.sum(y, axis=1, keepdims=True)
        s_acc[1] = s_acc[1] + jnp.sum(y * y, axis=1, keepdims=True)

        @pl.when(j == pl.num_programs(1) - 1)
        def _():
            mean = s_acc[0] * inv_hw
            var = s_acc[1] * inv_hw - mean * mean
            scale = gamma * lax.rsqrt(var + EPS)
            shift = beta - mean * scale
            out = y_acc[...] * scale + shift
            if relu:
                out = jnp.maximum(out, 0.0)
            o_ref[0] = out.astype(o_ref.dtype)


def _choose_tiling(n, kkc_p, cout, hw_pad, out_bytes, *,
                   vmem_budget_bytes, max_lane_tile):
    """Pick (whole?, images-per-step g, lane tile LT, HW steps) under a VMEM budget."""
    fixed = 2 * cout * kkc_p * 2                       # resident bf16 weight (x2 bufs)
    per_image = (2 * kkc_p * hw_pad * 2                # bf16 patch block, double-buffered
                 + 2 * cout * hw_pad * out_bytes       # output block, double-buffered
                 + cout * hw_pad * 4)                  # f32 conv-result temp
    lane_cap = max_lane_tile if max_lane_tile is not None else (1 << 62)

    whole_ok = (fixed + per_image <= vmem_budget_bytes) and (lane_cap >= hw_pad)
    if whole_ok:
        g_max = max(1, (vmem_budget_bytes - fixed) // per_image)
        g_max = min(g_max, max(1, lane_cap // hw_pad))
        g_max = min(g_max, max(1, n // 2))   # keep >= 2 batch steps for v7x's 2nd TC
        g = 1
        for cand in range(min(g_max, n), 0, -1):
            if n % cand == 0:
                g = cand
                break
        return dict(whole=True, g=g, lt=g * hw_pad, t_steps=1)

    # Regime B: tile HW; running-sum InstanceNorm across lane tiles.
    avail = (vmem_budget_bytes - fixed
             - cout * hw_pad * 4                       # y accumulator scratch
             - 2 * cout * hw_pad * out_bytes)          # output block, double-buffered
    lt_budget = max(128, avail // (2 * kkc_p * 2))
    lt_limit = min(lt_budget, lane_cap, hw_pad)
    lt = 128
    d = 128
    while d <= lt_limit:
        if hw_pad % d == 0:
            lt = d
        d += 128
    return dict(whole=False, g=1, lt=lt, t_steps=hw_pad // lt)


def conv_layer_pallas(x_nchw, weight, bias, gamma, beta, *, stride, relu=True,
                      vmem_budget_bytes=8 << 20, max_lane_tile=None):
    """x_nchw: (N, Cin, H, W); weight: (Cout, Cin, K, K).

    `bias` is accepted for API parity with nn.Conv2d but intentionally unused:
    InstanceNorm2d subtracts the per-(n, c) spatial mean, which cancels a
    per-channel conv bias exactly (identical numerics, less work).
    """
    del bias
    n, cin, h, w = x_nchw.shape
    cout, _, k, _ = weight.shape
    pad = k // 2
    out_h = (h + 2 * pad - k) // stride + 1
    out_w = (w + 2 * pad - k) // stride + 1
    hw = out_h * out_w
    hw_pad = _round_up(hw, 128)            # lane-dense stores & free slices
    kkc = k * k * cin
    kkc_p = _round_up(kkc, 16)             # bf16 sublane packing
    out_dtype = x_nchw.dtype               # emit bf16 here if the consumer tolerates it

    # --- plain-JAX glue: pad + im2col into (N, KKCp, HWp) bf16 (spatial on lanes).
    x_p = jnp.pad(x_nchw, ((0, 0), (0, 0), (pad, pad), (pad, pad)))
    taps = []
    for ki in range(k):
        for kj in range(k):
            taps.append(
                x_p[:, :, ki:ki + out_h * stride:stride,
                          kj:kj + out_w * stride:stride])          # (N,Cin,oh,ow)
    patches = jnp.stack(taps, axis=1).reshape(n, kkc, hw)          # (N,KKC,HW)
    patches = jnp.pad(patches, ((0, 0), (0, kkc_p - kkc), (0, hw_pad - hw)))
    patches = patches.astype(jnp.bfloat16)

    # weight[cout, (ki, kj, cin)] — matches the patch ordering; zero-pad KKC rows.
    w2 = jnp.transpose(weight, (0, 2, 3, 1)).reshape(cout, kkc)
    w2 = jnp.pad(w2, ((0, 0), (0, kkc_p - kkc))).astype(jnp.bfloat16)
    gb = jnp.stack([gamma, beta]).reshape(2, cout, 1).astype(jnp.float32)

    out_bytes = jnp.dtype(out_dtype).itemsize
    t = _choose_tiling(n, kkc_p, cout, hw_pad, out_bytes,
                       vmem_budget_bytes=vmem_budget_bytes,
                       max_lane_tile=max_lane_tile)
    whole, g, lt, t_steps = t["whole"], t["g"], t["lt"], t["t_steps"]

    if whole:
        # Lane-concatenate g images per batch group: (G, KKCp, g*HWp).
        big_g = n // g
        patches = (patches.reshape(big_g, g, kkc_p, hw_pad)
                   .transpose(0, 2, 1, 3)
                   .reshape(big_g, kkc_p, g * hw_pad))
        scratch_shapes = []
    else:
        scratch_shapes = [pltpu.VMEM((cout, hw_pad), jnp.float32),  # y accumulator
                          pltpu.VMEM((2, cout, 1), jnp.float32)]    # [sum; sum_sq]

    kernel = functools.partial(_conv_in_relu_kernel, whole=whole, g=g,
                               hw_real=hw, hw_pad=hw_pad, relu=relu)

    out = pl.pallas_call(
        kernel,
        out_shape=jax.ShapeDtypeStruct((n, cout, hw_pad), out_dtype),
        grid_spec=pltpu.PrefetchScalarGridSpec(
            num_scalar_prefetch=0,
            grid=(n // g, t_steps),
            in_specs=[
                pl.BlockSpec((1, kkc_p, lt), lambda i, j: (i, 0, j)),
                pl.BlockSpec((cout, kkc_p), lambda i, j: (0, 0)),
                pl.BlockSpec((2, cout, 1), lambda i, j: (0, 0, 0)),
            ],
            out_specs=pl.BlockSpec((g, cout, hw_pad), lambda i, j: (i, 0, 0)),
            scratch_shapes=scratch_shapes,
        ),
        compiler_params=pltpu.CompilerParams(
            dimension_semantics=("parallel", "arbitrary")),
    )(patches, w2, gb)

    # (N, Cout, HWp) is channel-major: drop lane padding, free reshape to NCHW.
    return out[:, :, :hw].reshape(n, cout, out_h, out_w)


def conv_layer_reference(x_nchw, weight, bias, gamma, beta, *, stride, relu=True):
    """Pure-JAX reference mirroring the PyTorch module (true f32 conv)."""
    k = weight.shape[-1]
    pad = k // 2
    y = lax.conv_general_dilated(
        x_nchw.astype(jnp.float32), weight.astype(jnp.float32),
        window_strides=(stride, stride),
        padding=((pad, pad), (pad, pad)),
        dimension_numbers=("NCHW", "OIHW", "NCHW"),
        precision=lax.Precision.HIGHEST)
    y = y + bias.reshape(1, -1, 1, 1)
    mean = jnp.mean(y, axis=(2, 3), keepdims=True)
    var = jnp.mean((y - mean) ** 2, axis=(2, 3), keepdims=True)
    y = (y - mean) * lax.rsqrt(var + EPS)
    y = y * gamma.reshape(1, -1, 1, 1) + beta.reshape(1, -1, 1, 1)
    if relu:
        y = jnp.maximum(y, 0.0)
    return y


if __name__ == "__main__":
    key = jax.random.PRNGKey(0)
    k_x, k_w, k_b, k_g, k_be, k_x2 = jax.random.split(key, 6)

    # ConvLayer(in_channels=4, out_channels=8, kernel_size=3, stride=1)
    N, CIN, H, W = 2, 4, 16, 16
    COUT, K, STRIDE = 8, 3, 1

    x = jax.random.normal(k_x, (N, CIN, H, W), dtype=jnp.float32)
    weight = jax.random.normal(k_w, (COUT, CIN, K, K), dtype=jnp.float32) * 0.1
    bias = jax.random.normal(k_b, (COUT,), dtype=jnp.float32) * 0.1
    gamma = 1.0 + 0.1 * jax.random.normal(k_g, (COUT,), dtype=jnp.float32)
    beta = 0.1 * jax.random.normal(k_be, (COUT,), dtype=jnp.float32)

    # References: tight check uses the same bf16-rounded conv inputs as the MXU
    # path (all accumulation / norm math f32 in both); coarse check vs full f32.
    xq = x.astype(jnp.bfloat16).astype(jnp.float32)
    wq = weight.astype(jnp.bfloat16).astype(jnp.float32)
    ref_q = conv_layer_reference(xq, wq, bias, gamma, beta, stride=STRIDE, relu=True)
    ref = conv_layer_reference(x, weight, bias, gamma, beta, stride=STRIDE, relu=True)

    # 1) Default path (regime A: whole images per step, >= 2 parallel batch steps).
    out_a = conv_layer_pallas(x, weight, bias, gamma, beta, stride=STRIDE, relu=True)
    out_a = jax.block_until_ready(out_a)
    assert out_a.shape == (N, COUT, H, W), out_a.shape
    assert jnp.allclose(out_a, ref_q, atol=2e-3, rtol=2e-3), \
        float(jnp.max(jnp.abs(out_a - ref_q)))
    assert jnp.allclose(out_a, ref, atol=5e-2, rtol=5e-2), \
        float(jnp.max(jnp.abs(out_a - ref)))

    # 2) Force the HW-tiled running-sum path (regime B) and verify it too.
    out_b = conv_layer_pallas(x, weight, bias, gamma, beta, stride=STRIDE,
                              relu=True, max_lane_tile=128)
    out_b = jax.block_until_ready(out_b)
    assert jnp.allclose(out_b, ref_q, atol=2e-3, rtol=2e-3), \
        float(jnp.max(jnp.abs(out_b - ref_q)))
    assert jnp.allclose(out_b, ref, atol=5e-2, rtol=5e-2), \
        float(jnp.max(jnp.abs(out_b - ref)))

    # 3) Larger batch exercises the fused multi-image matmul (g > 1) path.
    N2 = 8
    x2 = jax.random.normal(k_x2, (N2, CIN, H, W), dtype=jnp.float32)
    out_c = conv_layer_pallas(x2, weight, bias, gamma, beta, stride=STRIDE, relu=True)
    out_c = jax.block_until_ready(out_c)
    x2q = x2.astype(jnp.bfloat16).astype(jnp.float32)
    ref2_q = conv_layer_reference(x2q, wq, bias, gamma, beta, stride=STRIDE, relu=True)
    assert out_c.shape == (N2, COUT, H, W), out_c.shape
    assert jnp.allclose(out_c, ref2_q, atol=2e-3, rtol=2e-3), \
        float(jnp.max(jnp.abs(out_c - ref2_q)))

    print("KERNEL_OK")
</pallas_src>

<mosaic_0001>
module attributes {stable_mosaic.version = 11 : i64} {
  func.func @_conv_in_relu_kernel(%arg0: i32, %arg1: i32, %arg2: memref<1x48x256xbf16, #tpu.memory_space<vmem>>, %arg3: memref<8x48xbf16, #tpu.memory_space<vmem>>, %arg4: memref<2x8x1xf32, #tpu.memory_space<vmem>>, %arg5: memref<1x8x256xf32, #tpu.memory_space<vmem>>) attributes {dimension_semantics = [#tpu.dimension_semantics<parallel>, #tpu.dimension_semantics<arbitrary>], iteration_bounds = array<i64: 2, 1>, scalar_prefetch = 0 : i64, scratch_operands = 0 : i64, tpu.core_type = #tpu.core_type<tc>, window_params = [{transform_indices = @transform_0, window_bounds = array<i64: 1, 48, 256>}, {pipeline_mode = #tpu.pipeline_mode<synchronous>, transform_indices = @transform_1, window_bounds = array<i64: 8, 48>}, {pipeline_mode = #tpu.pipeline_mode<synchronous>, transform_indices = @transform_2, window_bounds = array<i64: 2, 8, 1>}, {transform_indices = @transform_3, window_bounds = array<i64: 1, 8, 256>}]} {
    %c0 = arith.constant 0 : index
    %c0_0 = arith.constant 0 : index
    %0 = vector.load %arg3[%c0, %c0_0] : memref<8x48xbf16, #tpu.memory_space<vmem>>, vector<8x48xbf16>
    %c0_1 = arith.constant 0 : index
    %c0_2 = arith.constant 0 : index
    %c0_3 = arith.constant 0 : index
    %1 = vector.load %arg4[%c0_1, %c0_2, %c0_3] : memref<2x8x1xf32, #tpu.memory_space<vmem>>, vector<1x8x1xf32>
    %2 = vector.shape_cast %1 : vector<1x8x1xf32> to vector<8x1xf32>
    %c1 = arith.constant 1 : index
    %c0_4 = arith.constant 0 : index
    %c0_5 = arith.constant 0 : index
    %3 = vector.load %arg4[%c1, %c0_4, %c0_5] : memref<2x8x1xf32, #tpu.memory_space<vmem>>, vector<1x8x1xf32>
    %4 = vector.shape_cast %3 : vector<1x8x1xf32> to vector<8x1xf32>
    %c0_6 = arith.constant 0 : index
    %c0_7 = arith.constant 0 : index
    %c0_8 = arith.constant 0 : index
    %5 = vector.load %arg2[%c0_6, %c0_7, %c0_8] : memref<1x48x256xbf16, #tpu.memory_space<vmem>>, vector<1x48x256xbf16>
    %6 = vector.shape_cast %5 : vector<1x48x256xbf16> to vector<48x256xbf16>
    %cst = arith.constant dense<0.000000e+00> : vector<8x256xf32>
    %7 = tpu.matmul %0, %6, %cst {dimension_numbers = #tpu.dot_dimension_numbers<[1], [0], [0], [1], [0, 0, 1, 1], [], []>} : vector<8x48xbf16>, vector<48x256xbf16>, vector<8x256xf32> -> vector<8x256xf32>
    %cst_9 = arith.constant dense<0.000000e+00> : vector<8xf32>
    %8 = vector.multi_reduction <add>, %7, %cst_9 [1] : vector<8x256xf32> to vector<8xf32>
    %9 = vector.shape_cast %8 : vector<8xf32> to vector<8x1xf32>
    %10 = arith.mulf %7, %7 : vector<8x256xf32>
    %cst_10 = arith.constant dense<0.000000e+00> : vector<8xf32>
    %11 = vector.multi_reduction <add>, %10, %cst_10 [1] : vector<8x256xf32> to vector<8xf32>
    %12 = vector.shape_cast %11 : vector<8xf32> to vector<8x1xf32>
    %cst_11 = arith.constant 3.906250e-03 : f32
    %13 = vector.broadcast %cst_11 : f32 to vector<8x1xf32>
    %14 = arith.mulf %9, %13 : vector<8x1xf32>
    %cst_12 = arith.constant 3.906250e-03 : f32
    %15 = vector.broadcast %cst_12 : f32 to vector<8x1xf32>
    %16 = arith.mulf %12, %15 : vector<8x1xf32>
    %17 = arith.mulf %14, %14 : vector<8x1xf32>
    %18 = arith.subf %16, %17 : vector<8x1xf32>
    %cst_13 = arith.constant 9.99999974E-6 : f32
    %19 = vector.broadcast %cst_13 : f32 to vector<8x1xf32>
    %20 = arith.addf %18, %19 : vector<8x1xf32>
    %21 = math.rsqrt %20 : vector<8x1xf32>
    %22 = arith.mulf %2, %21 : vector<8x1xf32>
    %23 = arith.mulf %14, %22 : vector<8x1xf32>
    %24 = arith.subf %4, %23 : vector<8x1xf32>
    %25 = vector.broadcast %22 : vector<8x1xf32> to vector<8x256xf32>
    %26 = arith.mulf %7, %25 : vector<8x256xf32>
    %27 = vector.broadcast %24 : vector<8x1xf32> to vector<8x256xf32>
    %28 = arith.addf %26, %27 : vector<8x256xf32>
    %cst_14 = arith.constant 0.000000e+00 : f32
    %29 = vector.broadcast %cst_14 : f32 to vector<8x256xf32>
    %30 = arith.maximumf %28, %29 : vector<8x256xf32>
    %c0_15 = arith.constant 0 : index
    %c0_16 = arith.constant 0 : index
    %c0_17 = arith.constant 0 : index
    %31 = vector.load %arg5[%c0_15, %c0_16, %c0_17] : memref<1x8x256xf32, #tpu.memory_space<vmem>>, vector<1x8x256xf32>
    %32 = vector.shape_cast %31 : vector<1x8x256xf32> to vector<8x256xf32>
    %33 = vector.shape_cast %30 : vector<8x256xf32> to vector<1x8x256xf32>
    tpu.vector_store %arg5[%c0_15, %c0_16, %c0_17], %33 {strides = array<i32>} : memref<1x8x256xf32, #tpu.memory_space<vmem>>, vector<1x8x256xf32>,
    return
  }
  func.func @transform_0(%arg0: i32, %arg1: i32) -> (i32, i32, i32) {
    %c0_i32 = arith.constant 0 : i32
    %c0_i32_0 = arith.constant 0 : i32
    return %arg0, %c0_i32, %arg1 : i32, i32, i32
  }
  func.func @transform_1(%arg0: i32, %arg1: i32) -> (i32, i32) {
    %c0_i32 = arith.constant 0 : i32
    %c0_i32_0 = arith.constant 0 : i32
    %c0_i32_1 = arith.constant 0 : i32
    return %c0_i32, %c0_i32_0 : i32, i32
  }
  func.func @transform_2(%arg0: i32, %arg1: i32) -> (i32, i32, i32) {
    %c0_i32 = arith.constant 0 : i32
    %c0_i32_0 = arith.constant 0 : i32
    %c0_i32_1 = arith.constant 0 : i32
    %c0_i32_2 = arith.constant 0 : i32
    return %c0_i32, %c0_i32_0, %c0_i32_1 : i32, i32, i32
  }
  func.func @transform_3(%arg0: i32, %arg1: i32) -> (i32, i32, i32) {
    %c0_i32 = arith.constant 0 : i32
    %c0_i32_0 = arith.constant 0 : i32
    %c0_i32_1 = arith.constant 0 : i32
    return %arg0, %c0_i32, %c0_i32_0 : i32, i32, i32
  }
}

</mosaic_0001>

<llo_original>
// kernel: tpu_custom_call.1
$region0: #{tpu_custom_call.1}
  #allocation0 [shape = 'u32[]', space=smem, size = 0x4, offset = 0x4, fixed_abs, tag = 'smem constant byte address 0x4 - core index']
  #allocation1 [shape = 'u32[72,128]{1,0:T(1,128)}', space=vmem, size = 0x9000, scoped, tag = 'internal scratch']
  %s0 = inlined_call_operand.hbm [shape: bf16[2,48,256], index: 0, kind: input, shape index: {}]
  %s1 = inlined_call_operand.vmem [shape: bf16[8,48], index: 1, kind: input, shape index: {}]
  %s2 = inlined_call_operand.vmem [shape: f32[2,8,1], index: 2, kind: input, shape index: {}]
  %s3 = inlined_call_operand.hbm [shape: f32[2,8,256], index: 3, kind: output, shape index: {}]
  %s4 = sld [smem:[#allocation0]]
  $region49: #{tpu_custom_call.1} parent=0
    _
  %s6 = ssub.s32 1, %s4
  %s7 = scalar_select 0, %s6, %s4
  $region1: #{tpu_custom_call.1} parent=0
    #allocation2 [shape = 'u8[49152]{0}', space=vmem, size = 0xc000, scoped, tag = 'input window, operand 0']
    #allocation3 [shape = 's32[2]{0}', space=sflag, size = 0x8, scoped, tag = 'scoped memory for tpu_custom_call.1']
    #allocation4 [shape = 's32[2]{0}', space=sflag, size = 0x8, scoped, tag = 'scoped memory for tpu_custom_call.1']
    #allocation5 [shape = 'u8[16384]{0}', space=vmem, size = 0x4000, scoped, tag = 'output window, operand 0']
    %8 = vsyncpa [#allocation3], 0
    %s9 = scalar_lea.sflag [#allocation3], 1
    %10 = vsyncpa %s9, 0
    %11 = vsyncpa [#allocation4], 0
    %s12 = scalar_lea.sflag [#allocation4], 1
    %13 = vsyncpa %s12, 0
    loop: start=0, step=1, limit=4
    $region2: #{tpu_custom_call.1} parent=1 // loop_pre_header
      _
    $region3: #{tpu_custom_call.1} parent=1 // loop_header
      %s15 = sphi 0, %s19
      %p16 = scmp.ge.s32.totalorder %s15, 4
      %s22 = sphi 0, %s34
      %s23 = sphi 0, %s30
      %s24 = sphi 0, %s22
      %s25 = sphi 0, %s23
      %s26 = sphi 0, %s24
      %s27 = sphi 0, %s25
      %s39 = sphi 0, %s41
      %s42 = sphi 0, %s39
      %s43 = sphi 0, %s42
      %s59 = sphi 0, %s43
      %s63 = sphi 0, %s63
      %s65 = sphi 0, %s63
      %s66 = sphi 0, %s65
      %s80 = sphi 0, %s66
      %s84 = sphi 0, %s84
      %s86 = sphi 0, %s84
      %s87 = sphi 0, %s86
      %s101 = sphi 0, %s87
      %s107 = sphi 0, %s109
      %s110 = sphi 0, %s107
      %s111 = sphi 0, %s110
      %s127 = sphi 0, %s111
    $region4: #{tpu_custom_call.1} parent=1 // loop_header_branch
      %18 = sbr.rel (%p16) target = $region8
    $region5: #{tpu_custom_call.1} parent=1 // loop_body
      %s20 = ssub.s32 %s15, 1
      %s21 = ssub.s32 %s15, 2
      %s28 = sadd.s32 1, %s23
      %p29 = scmp.ge.s32.totalorder %s28, 1
      %s30 = scalar_select %p29, 0, %s28
      %s31 = sadd.s32 1, %s22
      %s32 = scalar_select %p29, %s31, %s22
      %p33 = scmp.ge.s32.totalorder %s32, 2
      %s34 = scalar_select %p33, 0, %s32
      %s35 = ssub.s32 %s22, %s34
      %s36 = ssub.s32 %s23, %s30
      %s37 = sor.u32 %s35, %s36
      %p38 = scmp.eq.s32.totalorder %s37, 0
      %s40 = sadd.s32 %s39, 1
      %s41 = scalar_select %p38, %s39, %s40
      %p44 = pneg %p38
      %p45 = scmp.eq.s32.totalorder %s15, 1
      %p46 = por %p44, %p45
      %p47 = scmp.ne.s32.totalorder %s39, %s42
      %p48 = scmp.eq.s32.totalorder %s15, 0
      %p49 = por %p47, %p48
      %p50 = scmp.ne.s32.totalorder %s39, %s42
      %p51 = scmp.eq.s32.totalorder %s20, 1
      %p52 = por %p50, %p51
      %p53 = scmp.ne.s32.totalorder %s42, %s43
      %p54 = scmp.eq.s32.totalorder %s20, 0
      %p55 = por %p53, %p54
      %p56 = scmp.ne.s32.totalorder %s42, %s43
      %p57 = scmp.eq.s32.totalorder %s21, 1
      %p58 = por %p56, %p57
      %p60 = scmp.ne.s32.totalorder %s43, %s59
      %p61 = scmp.eq.s32.totalorder %s21, 0
      %p62 = por %p60, %p61
      %s64 = sadd.s32 %s63, 1
      %p67 = scmp.eq.s32.totalorder %s15, 1
      %p68 = scmp.ne.s32.totalorder %s63, %s65
      %p69 = scmp.eq.s32.totalorder %s15, 0
      %p70 = por %p68, %p69
      %p71 = scmp.ne.s32.totalorder %s63, %s65
      %p72 = scmp.eq.s32.totalorder %s20, 1
      %p73 = por %p71, %p72
      %p74 = scmp.ne.s32.totalorder %s65, %s66
      %p75 = scmp.eq.s32.totalorder %s20, 0
      %p76 = por %p74, %p75
      %p77 = scmp.ne.s32.totalorder %s65, %s66
      %p78 = scmp.eq.s32.totalorder %s21, 1
      %p79 = por %p77, %p78
      %p81 = scmp.ne.s32.totalorder %s66, %s80
      %p82 = scmp.eq.s32.totalorder %s21, 0
      %p83 = por %p81, %p82
      %s85 = sadd.s32 %s84, 1
      %p88 = scmp.eq.s32.totalorder %s15, 1
      %p89 = scmp.ne.s32.totalorder %s84, %s86
      %p90 = scmp.eq.s32.totalorder %s15, 0
      %p91 = por %p89, %p90
      %p92 = scmp.ne.s32.totalorder %s84, %s86
      %p93 = scmp.eq.s32.totalorder %s20, 1
      %p94 = por %p92, %p93
      %p95 = scmp.ne.s32.totalorder %s86, %s87
      %p96 = scmp.eq.s32.totalorder %s20, 0
      %p97 = por %p95, %p96
      %p98 = scmp.ne.s32.totalorder %s86, %s87
      %p99 = scmp.eq.s32.totalorder %s21, 1
      %p100 = por %p98, %p99
      %p102 = scmp.ne.s32.totalorder %s87, %s101
      %p103 = scmp.eq.s32.totalorder %s21, 0
      %p104 = por %p102, %p103
      %s105 = ssub.s32 %s22, %s34
      %p106 = scmp.eq.s32.totalorder %s105, 0
      %s108 = sadd.s32 %s107, 1
      %s109 = scalar_select %p106, %s107, %s108
      %p112 = pneg %p106
      %p113 = scmp.eq.s32.totalorder %s15, 1
      %p114 = por %p112, %p113
      %p115 = scmp.ne.s32.totalorder %s107, %s110
      %p116 = scmp.eq.s32.totalorder %s15, 0
      %p117 = por %p115, %p116
      %p118 = scmp.ne.s32.totalorder %s107, %s110
      %p119 = scmp.eq.s32.totalorder %s20, 1
      %p120 = por %p118, %p119
      %p121 = scmp.ne.s32.totalorder %s110, %s111
      %p122 = scmp.eq.s32.totalorder %s20, 0
      %p123 = por %p121, %p122
      %p124 = scmp.ne.s32.totalorder %s110, %s111
      %p125 = scmp.eq.s32.totalorder %s21, 1
      %p126 = por %p124, %p125
      %p128 = scmp.ne.s32.totalorder %s111, %s127
      %p129 = scmp.eq.s32.totalorder %s21, 0
      %p130 = por %p128, %p129
      %p131 = scmp.le.s32.totalorder 1, %s15
      %p132 = scmp.lt.s32.totalorder %s15, 3
      %p133 = pnand %p131, %p132
      %p134 = pneg %p133
      // Predicated region
      $region9: #{tpu_custom_call.1} parent=5 // pred_check
        _
      $region10: #{tpu_custom_call.1} parent=5 // pred_check_branch
        %136 = sbr.rel (%p133) target = $region12
      $region11: #{tpu_custom_call.1} parent=5 // pred_region
        %s137 = ssub.s32 %s15, 1
        // Predicated region
        $region13: #{tpu_custom_call.1} parent=11 // pred_check
          %p138 = pneg %p76
        $region14: #{tpu_custom_call.1} parent=11 // pred_check_branch
          %140 = sbr.rel (%p138) target = $region16
        $region15: #{tpu_custom_call.1} parent=11 // pred_region
          _
        $region16: #{tpu_custom_call.1} parent=11 // pred_fallthru
          _
        // Predicated region
        $region17: #{tpu_custom_call.1} parent=11 // pred_check
          %p141 = pneg %p97
        $region18: #{tpu_custom_call.1} parent=11 // pred_check_branch
          %143 = sbr.rel (%p141) target = $region20
        $region19: #{tpu_custom_call.1} parent=11 // pred_region
          _
        $region20: #{tpu_custom_call.1} parent=11 // pred_fallthru
          _
      $region12: #{tpu_custom_call.1} parent=5 // pred_fallthru
        _
      %p144 = scmp.lt.s32.totalorder %s15, 2
      // Predicated region
      $region21: #{tpu_custom_call.1} parent=5 // pred_check
        %p145 = pneg %p144
      $region22: #{tpu_custom_call.1} parent=5 // pred_check_branch
        %147 = sbr.rel (%p145) target = $region24
      $region23: #{tpu_custom_call.1} parent=5 // pred_region
        // Predicated region
        $region25: #{tpu_custom_call.1} parent=23 // pred_check
          %p148 = pneg %p49
        $region26: #{tpu_custom_call.1} parent=23 // pred_check_branch
          %150 = sbr.rel (%p148) target = $region28
        $region27: #{tpu_custom_call.1} parent=23 // pred_region
          %s151 = sand.u32 %s39, 1
          %s152 = scalar_lea.sflag [#allocation3], %s151
          %s153 = sand.u32 %s39, 1
          %s154 = smul.addr %s153, 48
          %s155 = scalar_lea.vmem [#allocation2], %s154
          %s156 = smul.u32 2, %s23
          %158 = vsyncadd %s152, 0
          %s159 = smul.addr %s22, 12
          %s160 = sadd.s32 %s156, %s159
          %s161 = smul.addr %s160, 4
          %s162 = scalar_lea.hbm %s0, %s161
          %s163 = sshll.u32 %s162, 4
          %s164 = int_to_ptr.hbm [resolvable:$true] %s163
          %s165 = sshll.u32 %s155, 4
          %s166 = int_to_ptr.vmem [resolvable:$true] %s165
          %171 = dma.hbm_to_vmem [thread:$0]  %s164, 768, %s166, %s152, 128, 128, 8
        $region28: #{tpu_custom_call.1} parent=23 // pred_fallthru
          _
      $region24: #{tpu_custom_call.1} parent=5 // pred_fallthru
        _
      %p172 = scmp.le.s32.totalorder 1, %s15
      %p173 = scmp.lt.s32.totalorder %s15, 3
      %p174 = pnand %p172, %p173
      %p175 = pneg %p174
      // Predicated region
      $region29: #{tpu_custom_call.1} parent=5 // pred_check
        _
      $region30: #{tpu_custom_call.1} parent=5 // pred_check_branch
        %177 = sbr.rel (%p174) target = $region32
      $region31: #{tpu_custom_call.1} parent=5 // pred_region
        %s178 = ssub.s32 %s15, 1
        %s179 = sand.u32 %s42, 1
        %s180 = scalar_lea.sflag [#allocation3], %s179
        %s181 = sand.u32 %s42, 1
        %s182 = smul.addr %s181, 48
        %s183 = scalar_lea.vmem [#allocation2], %s182
        // Predicated region
        $region33: #{tpu_custom_call.1} parent=31 // pred_check
          %p184 = pneg %p55
        $region34: #{tpu_custom_call.1} parent=31 // pred_check_branch
          %186 = sbr.rel (%p184) target = $region36
        $region35: #{tpu_custom_call.1} parent=31 // pred_region
          %188 = dma.done %s180, 768
        $region36: #{tpu_custom_call.1} parent=31 // pred_fallthru
          _
        %s189 = sand.u32 %s42, 1
        %s190 = scalar_lea.sflag [#allocation3], %s189
        %s191 = sand.u32 %s42, 1
        %s192 = smul.addr %s191, 48
        %s193 = scalar_lea.vmem [#allocation2], %s192
        %p194 = pneg %p55
        %p195 = pneg %p52
        %p196 = pneg %p76
        %p197 = pneg %p73
        %p198 = pneg %p97
        %p199 = pneg %p94
        %p200 = pneg %p123
        %p201 = pneg %p120
        %s202 = sand.u32 %s110, 1
        %s203 = scalar_lea.sflag [#allocation4], %s202
        %s204 = sand.u32 %s110, 1
        %s205 = smul.addr %s204, 16
        %s206 = scalar_lea.vmem [#allocation5], %s205
        %s207 = smul.u32 2, %s25
        %v209 = vld [vmem:[%s1] sm:$0xf]
        %v210 = vld [vmem:[%s2] sm:$0xff]
        %s211 = scalar_lea.vmem %s2, 8
        %v212 = vld [vmem:[%s211] sm:$0xff]
        %v213 = vld [vmem:[%s183] sm:$0xff]
        %v214 = vld [vmem:[%s183 + $0x8] sm:$0xff]
        %v215 = vld [vmem:[%s183 + $0x10] sm:$0xff]
        %v216 = vld [vmem:[%s183 + $0x18] sm:$0xff]
        %v217 = vld [vmem:[%s183 + $0x20] sm:$0xff]
        %v218 = vld [vmem:[%s183 + $0x28] sm:$0xff]
        %v225 = vunpack.c.l.b16 %v213
        %v226 = vunpack.c.h.b16 %v213
        %v227 = vunpack.c.l.b16 %v214
        %v228 = vunpack.c.h.b16 %v214
        %v229 = vunpack.c.l.b16 %v215
        %v230 = vunpack.c.h.b16 %v215
        %v231 = vunpack.c.l.b16 %v216
        %v232 = vunpack.c.h.b16 %v216
        %v233 = vunpack.c.l.b16 %v217
        %v234 = vunpack.c.h.b16 %v217
        %v235 = vunpack.c.l.b16 %v218
        %v236 = vunpack.c.h.b16 %v218
        %v237 = vpack.c.b16 %v227, %v225
        %v238 = vpack.c.b16 %v228, %v226
        %v239 = vpack.c.b16 %v231, %v229
        %v240 = vpack.c.b16 %v232, %v230
        %v241 = vpack.c.b16 %v235, %v233
        %v242 = vpack.c.b16 %v236, %v234
        %vm249 = vcmask 392192
        %v251 = vsel %vm249, %v209, 0
        %253 = vmatpush.bf16.msra.mxu0 0
        %254 = vmatpush.bf16.msra.mxu0 0
        %255 = vmatpush.bf16.msra.mxu0 0
        %256 = vmatpush.bf16.msra.mxu0 0
        %257 = vmatpush.bf16.msra.mxu0 0
        %258 = vmatpush.bf16.msra.mxu0 %v241
        %259 = vmatpush.bf16.msra.mxu0 %v239
        %260 = vmatpush.bf16.msra.mxu0 %v237
        %261 = vmatmul.bf16.gmra.mxu0 %v251
        %v262 = vpop.f32.mrf.mxu0
        %v263 = vadd.f32 0.0, %v262
        %v264 = vpop.f32.mrf.mxu0
        %265 = vdwg.mxu0
        %266 = vmatpush.bf16.msra.mxu0 0
        %267 = vmatpush.bf16.msra.mxu0 0
        %268 = vmatpush.bf16.msra.mxu0 0
        %269 = vmatpush.bf16.msra.mxu0 0
        %270 = vmatpush.bf16.msra.mxu0 0
        %271 = vmatpush.bf16.msra.mxu0 %v242
        %272 = vmatpush.bf16.msra.mxu0 %v240
        %273 = vmatpush.bf16.msra.mxu0 %v238
        %274 = vmatmul.bf16.gmra.mxu0 %v251
        %v275 = vpop.f32.mrf.mxu0
        %v276 = vadd.f32 0.0, %v275
        %v277 = vpop.f32.mrf.mxu0
        %278 = vdwg.mxu0
        %v279 = vadd.f32 %v263, %v276
        %280 = vadd.xlane.f32.xlu0 %v279
        %v281 = vpop.xlane.xlu0 %280
        %v282 = vmul.f32 %v263, %v263
        %v283 = vmul.f32 %v276, %v276
        %v284 = vadd.f32 %v282, %v283
        %285 = vadd.xlane.f32.xlu0 %v284
        %v286 = vpop.xlane.xlu0 %285
        %v287 = vmul.f32 %v281, 0.00390625
        %v288 = vmul.f32 %v286, 0.00390625
        %v289 = vmul.f32 %v287, %v287
        %v290 = vsub.f32 %v288, %v289
        %v291 = vadd.f32 %v290, 1e-05
        %v292 = vrsqrt.pop %v291
        %v293 = vmul.f32 %v292, %v291
        %v294 = vmul.f32 %v293, %v292
        %v295 = vmul.f32 0.5, %v294
        %v296 = vsub.f32 1.5, %v295
        %v297 = vmul.f32 %v292, %v296
        %vm298 = vweird.f32 %v291
        %vm299 = vweird.f32 %v292
        %vm300 = vmor %vm298, %vm299
        %v301 = vsel %vm300, %v292, %v297
        %v302 = vmul.f32 %v210, %v301
        %v303 = vmul.f32 %v287, %v302
        %v304 = vsub.f32 %v212, %v303
        %306 = vset.pattern.permute.xlu0 0
        %307 = vperm.xlu0 %306, %v302
        %v308 = vpop.permute.xlu0 %307
        %v310 = vmul.f32 %v263, %v308
        %v311 = vmul.f32 %v276, %v308
        %313 = vset.pattern.permute.xlu0 0
        %314 = vperm.xlu0 %313, %v304
        %v315 = vpop.permute.xlu0 %314
        %v317 = vadd.f32 %v310, %v315
        %v318 = vadd.f32 %v311, %v315
        %v319 = vmax.f32 %v317, 0.0
        %v320 = vmax.f32 %v318, 0.0
        %321 = vst [vmem:[%s206] sm:$0xff] %v319
        %322 = vst [vmem:[%s206 + $0x8] sm:$0xff] %v320
        %s323 = sand.u32 %s110, 1
        %s324 = scalar_lea.sflag [#allocation4], %s323
        %s325 = sand.u32 %s110, 1
        %s326 = smul.addr %s325, 16
        %s327 = scalar_lea.vmem [#allocation5], %s326
        // Predicated region
        $region37: #{tpu_custom_call.1} parent=31 // pred_check
          %p328 = pneg %p120
        $region38: #{tpu_custom_call.1} parent=31 // pred_check_branch
          %330 = sbr.rel (%p328) target = $region40
        $region39: #{tpu_custom_call.1} parent=31 // pred_region
          %332 = vsyncadd %s324, 0
          %s333 = smul.addr %s24, 2
          %s334 = smul.addr %s333, 8
          %s335 = scalar_lea.hbm %s3, %s334
          %s337 = sshll.u32 %s327, 4
          %s338 = int_to_ptr.vmem [resolvable:$true] %s337
          %s339 = sshll.u32 %s335, 4
          %s340 = int_to_ptr.hbm [resolvable:$true] %s339
          %342 = dma.vmem_to_hbm [thread:$0]  %s338, 256, %s340, %s324
        $region40: #{tpu_custom_call.1} parent=31 // pred_fallthru
          _
      $region32: #{tpu_custom_call.1} parent=5 // pred_fallthru
        _
      %p343 = scmp.le.s32.totalorder 2, %s15
      // Predicated region
      $region41: #{tpu_custom_call.1} parent=5 // pred_check
        %p344 = pneg %p343
      $region42: #{tpu_custom_call.1} parent=5 // pred_check_branch
        %346 = sbr.rel (%p344) target = $region44
      $region43: #{tpu_custom_call.1} parent=5 // pred_region
        %s347 = ssub.s32 %s15, 2
        // Predicated region
        $region45: #{tpu_custom_call.1} parent=43 // pred_check
          %p348 = pneg %p126
        $region46: #{tpu_custom_call.1} parent=43 // pred_check_branch
          %350 = sbr.rel (%p348) target = $region48
        $region47: #{tpu_custom_call.1} parent=43 // pred_region
          %s351 = sand.u32 %s111, 1
          %s352 = scalar_lea.sflag [#allocation4], %s351
          %s353 = sand.u32 %s111, 1
          %s354 = smul.addr %s353, 16
          %s355 = scalar_lea.vmem [#allocation5], %s354
          %357 = dma.done %s352, 256
        $region48: #{tpu_custom_call.1} parent=43 // pred_fallthru
          _
      $region44: #{tpu_custom_call.1} parent=5 // pred_fallthru
        _
    $region6: #{tpu_custom_call.1} parent=1 // loop_footer
      %s19 = sadd.s32 1, %s15
    $region7: #{tpu_custom_call.1} parent=1 // loop_footer_branch
      %14 = sbr.rel target = $region3
    $region8: #{tpu_custom_call.1} parent=1 // loop_exit
      _
    %358 = vsyncpa [#allocation3], 1
    %s359 = scalar_lea.sflag [#allocation3], 1
    %360 = vsyncpa %s359, 1
    %361 = vsyncpa [#allocation4], 1
    %s362 = scalar_lea.sflag [#allocation4], 1
    %363 = vsyncpa %s362, 1

</llo_original>
